<compile_context>
chip_gen: v7x
topology: tpu7x:2x2x1
jax: 0.10.0
libtpu: 0.0.40
codegen_flags: <defaults>
</compile_context>

<pallas_src>
import jax
import jax.numpy as jnp
from jax.experimental import pallas as pl
from jax.experimental.pallas import tpu as pltpu

_LANES = 128                 # TPU vreg lane width; last dim of every block
_DEFAULT_TILE_ROWS = 8192    # 8192 x 128 x 4B = 4 MiB per f32 input block


def _rmse_kernel(yhat_ref, y_ref, out_ref):
    # Elementwise |yhat - y| on one lane-dense (tile, 128) block.
    # (== sqrt((yhat - y)^2) of the original module, numerically safer.)
    yh = yhat_ref[...].astype(out_ref.dtype)   # no-op when dtypes already match
    yt = y_ref[...].astype(out_ref.dtype)
    out_ref[...] = jnp.abs(yh - yt)


def _round_up(x, m):
    return -(-x // m) * m


def rmse_loss(yhat, y, *, tile_rows=_DEFAULT_TILE_ROWS, donate_yhat=False):
    """Elementwise RMSE (sqrt of un-reduced MSE); same shape as the inputs."""
    assert yhat.shape == y.shape, (yhat.shape, y.shape)
    orig_shape = yhat.shape
    out_dtype = jnp.result_type(yhat.dtype, y.dtype)

    n = 1
    for s in orig_shape:
        n *= s

    # Lane-dense 2-D layout: (rows, 128). Pad ONLY when n is not a multiple of
    # 128 (otherwise the reshape below is a free bitcast, no HBM copies).
    rows = max(1, -(-n // _LANES))
    padded_n = rows * _LANES

    def _pack(a):
        flat = a.reshape(-1)
        if padded_n != n:
            flat = jnp.pad(flat, (0, padded_n - n))
        return flat.reshape(rows, _LANES)

    yhat2d = _pack(yhat)
    y2d = _pack(y)

    # Row tile:
    #  * rows <= 8  -> a single full-array block (block dim == array dim is legal).
    #  * otherwise  -> multiple of 8 sublanes, capped so (a) the grid has >= 2
    #    blocks (lets v7x shard across its 2 TensorCores) and (b) the block is
    #    at most tile_rows (4 MiB f32 -> ~24 MiB live VMEM double-buffered,
    #    safe on v7x's 64 MiB and v5e/v6e's 128 MiB).
    if rows <= 8:
        tile = rows
    else:
        half = _round_up(-(-rows // 2), 8)
        tile = max(8, min(tile_rows, half))

    grid = (pl.cdiv(rows, tile),)   # partial final block masked by Pallas

    call_kwargs = {}
    if donate_yhat and yhat.dtype == out_dtype:
        # Caller allows overwriting yhat: write the result in place (3N -> 2N
        # words of HBM traffic). Only a win when no pad copy was needed.
        call_kwargs["input_output_aliases"] = {0: 0}

    out2d = pl.pallas_call(
        _rmse_kernel,
        out_shape=jax.ShapeDtypeStruct((rows, _LANES), out_dtype),
        grid=grid,
        in_specs=[
            pl.BlockSpec((tile, _LANES), lambda i: (i, 0)),
            pl.BlockSpec((tile, _LANES), lambda i: (i, 0)),
        ],
        out_specs=pl.BlockSpec((tile, _LANES), lambda i: (i, 0)),
        compiler_params=pltpu.CompilerParams(
            dimension_semantics=("parallel",),   # independent blocks -> 2 TCs on v7x
            vmem_limit_bytes=48 * 1024 * 1024,   # <= v7x 64 MiB; ~24 MiB actually live
        ),
        **call_kwargs,
    )(yhat2d, y2d)

    if padded_n != n:
        return out2d.reshape(-1)[:n].reshape(orig_shape)
    return out2d.reshape(orig_shape)


def _reference(yhat, y):
    # torch.sqrt(F.mse_loss(yhat, y, reduction='none'))
    return jnp.sqrt((yhat - y) ** 2)


if __name__ == "__main__":
    key = jax.random.PRNGKey(0)
    k1, k2, k3, k4, k5, k6 = jax.random.split(key, 6)

    # Case 1: batch=2, channels=4, 16x16 (n % 128 == 0 -> zero-copy wrapper path,
    # 2 grid blocks so the multi-block path is exercised).
    shape = (2, 4, 16, 16)
    yhat = jax.random.normal(k1, shape, dtype=jnp.float32)
    y = jax.random.normal(k2, shape, dtype=jnp.float32)
    out = jax.block_until_ready(rmse_loss(yhat, y))
    assert out.shape == shape, (out.shape, shape)
    assert jnp.allclose(out, _reference(yhat, y), rtol=1e-6, atol=1e-6)

    # Case 2: size not a multiple of 128 -> exercises the pad + partial-block path.
    shape2 = (3, 5, 7)
    yhat2 = jax.random.normal(k3, shape2, dtype=jnp.float32)
    y2 = jax.random.normal(k4, shape2, dtype=jnp.float32)
    out2 = jax.block_until_ready(rmse_loss(yhat2, y2))
    assert out2.shape == shape2
    assert jnp.allclose(out2, _reference(yhat2, y2), rtol=1e-6, atol=1e-6)

    # Case 3: bf16 inputs -> kernel computes natively in bf16 (no f32 upcast).
    shape3 = (2, 8, 32)
    yhat3 = jax.random.normal(k5, shape3, dtype=jnp.bfloat16)
    y3 = jax.random.normal(k6, shape3, dtype=jnp.bfloat16)
    out3 = jax.block_until_ready(rmse_loss(yhat3, y3))
    assert out3.shape == shape3 and out3.dtype == jnp.bfloat16
    assert jnp.array_equal(out3, jnp.abs(yhat3 - y3))  # |d| == sqrt(d^2) exactly here

    print("KERNEL_OK")
</pallas_src>

<mosaic_0001>
module attributes {stable_mosaic.version = 11 : i64} {
  func.func @_rmse_kernel(%arg0: i32, %arg1: memref<8x128xf32, #tpu.memory_space<vmem>>, %arg2: memref<8x128xf32, #tpu.memory_space<vmem>>, %arg3: memref<8x128xf32, #tpu.memory_space<vmem>>) attributes {dimension_semantics = [#tpu.dimension_semantics<parallel>], iteration_bounds = array<i64: 2>, scalar_prefetch = 0 : i64, scratch_operands = 0 : i64, tpu.core_type = #tpu.core_type<tc>, window_params = [{transform_indices = @transform_0, window_bounds = array<i64: 8, 128>}, {transform_indices = @transform_1, window_bounds = array<i64: 8, 128>}, {transform_indices = @transform_2, window_bounds = array<i64: 8, 128>}]} {
    %c0 = arith.constant 0 : index
    %c0_0 = arith.constant 0 : index
    %0 = vector.load %arg1[%c0, %c0_0] : memref<8x128xf32, #tpu.memory_space<vmem>>, vector<8x128xf32>
    %c0_1 = arith.constant 0 : index
    %c0_2 = arith.constant 0 : index
    %1 = vector.load %arg2[%c0_1, %c0_2] : memref<8x128xf32, #tpu.memory_space<vmem>>, vector<8x128xf32>
    %2 = arith.subf %0, %1 : vector<8x128xf32>
    %3 = math.absf %2 : vector<8x128xf32>
    %c0_3 = arith.constant 0 : index
    %c0_4 = arith.constant 0 : index
    %4 = vector.load %arg3[%c0_3, %c0_4] : memref<8x128xf32, #tpu.memory_space<vmem>>, vector<8x128xf32>
    tpu.vector_store %arg3[%c0_3, %c0_4], %3 {strides = array<i32>} : memref<8x128xf32, #tpu.memory_space<vmem>>, vector<8x128xf32>,
    return
  }
  func.func @transform_0(%arg0: i32) -> (i32, i32) {
    %c0_i32 = arith.constant 0 : i32
    %c0_i32_0 = arith.constant 0 : i32
    return %arg0, %c0_i32 : i32, i32
  }
  func.func @transform_1(%arg0: i32) -> (i32, i32) {
    %c0_i32 = arith.constant 0 : i32
    %c0_i32_0 = arith.constant 0 : i32
    return %arg0, %c0_i32 : i32, i32
  }
  func.func @transform_2(%arg0: i32) -> (i32, i32) {
    %c0_i32 = arith.constant 0 : i32
    %c0_i32_0 = arith.constant 0 : i32
    return %arg0, %c0_i32 : i32, i32
  }
}

</mosaic_0001>

<llo_original>
// kernel: tpu_custom_call.1
$region0: #{tpu_custom_call.1}
  #allocation0 [shape = 'u32[]', space=smem, size = 0x4, offset = 0x4, fixed_abs, tag = 'smem constant byte address 0x4 - core index']
  #allocation1 [shape = 'u32[144,128]{1,0:T(1,128)}', space=vmem, size = 0x12000, scoped, tag = 'internal scratch']
  %s0 = inlined_call_operand.hbm [shape: f32[16,128], index: 0, kind: input, shape index: {}]
  %s1 = inlined_call_operand.hbm [shape: f32[16,128], index: 1, kind: input, shape index: {}]
  %s2 = inlined_call_operand.hbm [shape: f32[16,128], index: 2, kind: output, shape index: {}]
  %s3 = sld [smem:[#allocation0]]
  $region49: #{tpu_custom_call.1} parent=0
    _
  %s5 = ssub.s32 1, %s3
  %s6 = scalar_select 0, %s5, %s3
  $region1: #{tpu_custom_call.1} parent=0
    #allocation2 [shape = 'u8[8192]{0}', space=vmem, size = 0x2000, scoped, tag = 'input window, operand 0']
    #allocation3 [shape = 's32[2]{0}', space=sflag, size = 0x8, scoped, tag = 'scoped memory for tpu_custom_call.1']
    #allocation4 [shape = 's32[2]{0}', space=sflag, size = 0x8, scoped, tag = 'scoped memory for tpu_custom_call.1']
    #allocation5 [shape = 'u8[8192]{0}', space=vmem, size = 0x2000, scoped, tag = 'input window, operand 1']
    #allocation6 [shape = 's32[2]{0}', space=sflag, size = 0x8, scoped, tag = 'scoped memory for tpu_custom_call.1']
    #allocation7 [shape = 'u8[8192]{0}', space=vmem, size = 0x2000, scoped, tag = 'output window, operand 0']
    %7 = vsyncpa [#allocation3], 0
    %s8 = scalar_lea.sflag [#allocation3], 1
    %9 = vsyncpa %s8, 0
    %10 = vsyncpa [#allocation6], 0
    %s11 = scalar_lea.sflag [#allocation6], 1
    %12 = vsyncpa %s11, 0
    %13 = vsyncpa [#allocation4], 0
    %s14 = scalar_lea.sflag [#allocation4], 1
    %15 = vsyncpa %s14, 0
    loop: start=0, step=1, limit=4
    $region2: #{tpu_custom_call.1} parent=1 // loop_pre_header
      _
    $region3: #{tpu_custom_call.1} parent=1 // loop_header
      %s17 = sphi 0, %s21
      %p18 = scmp.ge.s32.totalorder %s17, 4
      %s27 = sphi 0, %s29
      %s30 = sphi 0, %s27
      %s31 = sphi 0, %s30
      %s47 = sphi 0, %s31
      %s53 = sphi 0, %s55
      %s56 = sphi 0, %s53
      %s57 = sphi 0, %s56
      %s73 = sphi 0, %s57
      %s79 = sphi 0, %s81
      %s82 = sphi 0, %s79
      %s83 = sphi 0, %s82
      %s99 = sphi 0, %s83
    $region4: #{tpu_custom_call.1} parent=1 // loop_header_branch
      %20 = sbr.rel (%p18) target = $region8
    $region5: #{tpu_custom_call.1} parent=1 // loop_body
      %s22 = ssub.s32 %s17, 1
      %s23 = ssub.s32 %s17, 2
      %s24 = sadd.s32 %s17, 1
      %s25 = ssub.s32 %s17, %s24
      %p26 = scmp.eq.s32.totalorder %s25, 0
      %s28 = sadd.s32 %s27, 1
      %s29 = scalar_select %p26, %s27, %s28
      %p32 = pneg %p26
      %p33 = scmp.eq.s32.totalorder %s17, 1
      %p34 = por %p32, %p33
      %p35 = scmp.ne.s32.totalorder %s27, %s30
      %p36 = scmp.eq.s32.totalorder %s17, 0
      %p37 = por %p35, %p36
      %p38 = scmp.ne.s32.totalorder %s27, %s30
      %p39 = scmp.eq.s32.totalorder %s22, 1
      %p40 = por %p38, %p39
      %p41 = scmp.ne.s32.totalorder %s30, %s31
      %p42 = scmp.eq.s32.totalorder %s22, 0
      %p43 = por %p41, %p42
      %p44 = scmp.ne.s32.totalorder %s30, %s31
      %p45 = scmp.eq.s32.totalorder %s23, 1
      %p46 = por %p44, %p45
      %p48 = scmp.ne.s32.totalorder %s31, %s47
      %p49 = scmp.eq.s32.totalorder %s23, 0
      %p50 = por %p48, %p49
      %s51 = ssub.s32 %s17, %s24
      %p52 = scmp.eq.s32.totalorder %s51, 0
      %s54 = sadd.s32 %s53, 1
      %s55 = scalar_select %p52, %s53, %s54
      %p58 = pneg %p52
      %p59 = scmp.eq.s32.totalorder %s17, 1
      %p60 = por %p58, %p59
      %p61 = scmp.ne.s32.totalorder %s53, %s56
      %p62 = scmp.eq.s32.totalorder %s17, 0
      %p63 = por %p61, %p62
      %p64 = scmp.ne.s32.totalorder %s53, %s56
      %p65 = scmp.eq.s32.totalorder %s22, 1
      %p66 = por %p64, %p65
      %p67 = scmp.ne.s32.totalorder %s56, %s57
      %p68 = scmp.eq.s32.totalorder %s22, 0
      %p69 = por %p67, %p68
      %p70 = scmp.ne.s32.totalorder %s56, %s57
      %p71 = scmp.eq.s32.totalorder %s23, 1
      %p72 = por %p70, %p71
      %p74 = scmp.ne.s32.totalorder %s57, %s73
      %p75 = scmp.eq.s32.totalorder %s23, 0
      %p76 = por %p74, %p75
      %s77 = ssub.s32 %s17, %s24
      %p78 = scmp.eq.s32.totalorder %s77, 0
      %s80 = sadd.s32 %s79, 1
      %s81 = scalar_select %p78, %s79, %s80
      %p84 = pneg %p78
      %p85 = scmp.eq.s32.totalorder %s17, 1
      %p86 = por %p84, %p85
      %p87 = scmp.ne.s32.totalorder %s79, %s82
      %p88 = scmp.eq.s32.totalorder %s17, 0
      %p89 = por %p87, %p88
      %p90 = scmp.ne.s32.totalorder %s79, %s82
      %p91 = scmp.eq.s32.totalorder %s22, 1
      %p92 = por %p90, %p91
      %p93 = scmp.ne.s32.totalorder %s82, %s83
      %p94 = scmp.eq.s32.totalorder %s22, 0
      %p95 = por %p93, %p94
      %p96 = scmp.ne.s32.totalorder %s82, %s83
      %p97 = scmp.eq.s32.totalorder %s23, 1
      %p98 = por %p96, %p97
      %p100 = scmp.ne.s32.totalorder %s83, %s99
      %p101 = scmp.eq.s32.totalorder %s23, 0
      %p102 = por %p100, %p101
      %p103 = scmp.le.s32.totalorder 1, %s17
      %p104 = scmp.lt.s32.totalorder %s17, 3
      %p105 = pnand %p103, %p104
      %p106 = pneg %p105
      // Predicated region
      $region9: #{tpu_custom_call.1} parent=5 // pred_check
        _
      $region10: #{tpu_custom_call.1} parent=5 // pred_check_branch
        %108 = sbr.rel (%p105) target = $region12
      $region11: #{tpu_custom_call.1} parent=5 // pred_region
        %s109 = ssub.s32 %s17, 1
      $region12: #{tpu_custom_call.1} parent=5 // pred_fallthru
        _
      %p110 = scmp.lt.s32.totalorder %s17, 2
      // Predicated region
      $region13: #{tpu_custom_call.1} parent=5 // pred_check
        %p111 = pneg %p110
      $region14: #{tpu_custom_call.1} parent=5 // pred_check_branch
        %113 = sbr.rel (%p111) target = $region16
      $region15: #{tpu_custom_call.1} parent=5 // pred_region
        // Predicated region
        $region17: #{tpu_custom_call.1} parent=15 // pred_check
          %p114 = pneg %p37
        $region18: #{tpu_custom_call.1} parent=15 // pred_check_branch
          %116 = sbr.rel (%p114) target = $region20
        $region19: #{tpu_custom_call.1} parent=15 // pred_region
          %s117 = sand.u32 %s27, 1
          %s118 = scalar_lea.sflag [#allocation3], %s117
          %s119 = sand.u32 %s27, 1
          %s120 = smul.addr %s119, 8
          %s121 = scalar_lea.vmem [#allocation2], %s120
          %s123 = ssub.s32 128, 128
          %124 = vsyncadd %s118, %s123
          %s125 = smul.addr %s17, 128
          %s126 = scalar_lea.hbm %s0, %s125
          %s128 = sshll.u32 %s121, 4
          %s129 = int_to_ptr.vmem [resolvable:$true] %s128
          %131 = dma.hbm_to_vmem [thread:$0]  %s126, 128, %s129, %s118
        $region20: #{tpu_custom_call.1} parent=15 // pred_fallthru
          _
        // Predicated region
        $region21: #{tpu_custom_call.1} parent=15 // pred_check
          %p132 = pneg %p63
        $region22: #{tpu_custom_call.1} parent=15 // pred_check_branch
          %134 = sbr.rel (%p132) target = $region24
        $region23: #{tpu_custom_call.1} parent=15 // pred_region
          %s135 = sand.u32 %s53, 1
          %s136 = scalar_lea.sflag [#allocation6], %s135
          %s137 = sand.u32 %s53, 1
          %s138 = smul.addr %s137, 8
          %s139 = scalar_lea.vmem [#allocation5], %s138
          %s141 = ssub.s32 128, 128
          %142 = vsyncadd %s136, %s141
          %s143 = smul.addr %s17, 128
          %s144 = scalar_lea.hbm %s1, %s143
          %s146 = sshll.u32 %s139, 4
          %s147 = int_to_ptr.vmem [resolvable:$true] %s146
          %149 = dma.hbm_to_vmem [thread:$0]  %s144, 128, %s147, %s136
        $region24: #{tpu_custom_call.1} parent=15 // pred_fallthru
          _
      $region16: #{tpu_custom_call.1} parent=5 // pred_fallthru
        _
      %p150 = scmp.le.s32.totalorder 1, %s17
      %p151 = scmp.lt.s32.totalorder %s17, 3
      %p152 = pnand %p150, %p151
      %p153 = pneg %p152
      // Predicated region
      $region25: #{tpu_custom_call.1} parent=5 // pred_check
        _
      $region26: #{tpu_custom_call.1} parent=5 // pred_check_branch
        %155 = sbr.rel (%p152) target = $region28
      $region27: #{tpu_custom_call.1} parent=5 // pred_region
        %s156 = ssub.s32 %s17, 1
        %s157 = sand.u32 %s30, 1
        %s158 = scalar_lea.sflag [#allocation3], %s157
        %s159 = sand.u32 %s30, 1
        %s160 = smul.addr %s159, 8
        %s161 = scalar_lea.vmem [#allocation2], %s160
        // Predicated region
        $region29: #{tpu_custom_call.1} parent=27 // pred_check
          %p162 = pneg %p43
        $region30: #{tpu_custom_call.1} parent=27 // pred_check_branch
          %164 = sbr.rel (%p162) target = $region32
        $region31: #{tpu_custom_call.1} parent=27 // pred_region
          %165 = dma.done %s158, 128
        $region32: #{tpu_custom_call.1} parent=27 // pred_fallthru
          _
        %s166 = sand.u32 %s56, 1
        %s167 = scalar_lea.sflag [#allocation6], %s166
        %s168 = sand.u32 %s56, 1
        %s169 = smul.addr %s168, 8
        %s170 = scalar_lea.vmem [#allocation5], %s169
        // Predicated region
        $region33: #{tpu_custom_call.1} parent=27 // pred_check
          %p171 = pneg %p69
        $region34: #{tpu_custom_call.1} parent=27 // pred_check_branch
          %173 = sbr.rel (%p171) target = $region36
        $region35: #{tpu_custom_call.1} parent=27 // pred_region
          %174 = dma.done %s167, 128
        $region36: #{tpu_custom_call.1} parent=27 // pred_fallthru
          _
        %s175 = sand.u32 %s30, 1
        %s176 = scalar_lea.sflag [#allocation3], %s175
        %s177 = sand.u32 %s30, 1
        %s178 = smul.addr %s177, 8
        %s179 = scalar_lea.vmem [#allocation2], %s178
        %p180 = pneg %p43
        %p181 = pneg %p40
        %s182 = sand.u32 %s56, 1
        %s183 = scalar_lea.sflag [#allocation6], %s182
        %s184 = sand.u32 %s56, 1
        %s185 = smul.addr %s184, 8
        %s186 = scalar_lea.vmem [#allocation5], %s185
        %p187 = pneg %p69
        %p188 = pneg %p66
        %p189 = pneg %p95
        %p190 = pneg %p92
        %s191 = sand.u32 %s82, 1
        %s192 = scalar_lea.sflag [#allocation4], %s191
        %s193 = sand.u32 %s82, 1
        %s194 = smul.addr %s193, 8
        %s195 = scalar_lea.vmem [#allocation7], %s194
        %v196 = vld [vmem:[%s161] sm:$0xff]
        %v197 = vld [vmem:[%s170] sm:$0xff]
        %v198 = vsub.f32 %v196, %v197
        %v199 = vand.u32 2147483647, %v198
        %200 = vst [vmem:[%s195] sm:$0xff] %v199
        %s201 = sand.u32 %s82, 1
        %s202 = scalar_lea.sflag [#allocation4], %s201
        %s203 = sand.u32 %s82, 1
        %s204 = smul.addr %s203, 8
        %s205 = scalar_lea.vmem [#allocation7], %s204
        // Predicated region
        $region37: #{tpu_custom_call.1} parent=27 // pred_check
          %p206 = pneg %p92
        $region38: #{tpu_custom_call.1} parent=27 // pred_check_branch
          %208 = sbr.rel (%p206) target = $region40
        $region39: #{tpu_custom_call.1} parent=27 // pred_region
          %s210 = ssub.s32 128, 128
          %211 = vsyncadd %s202, %s210
          %s212 = smul.addr %s22, 128
          %s213 = scalar_lea.hbm %s2, %s212
          %s215 = sshll.u32 %s205, 4
          %s216 = int_to_ptr.vmem [resolvable:$true] %s215
          %218 = dma.vmem_to_hbm [thread:$0]  %s216, 128, %s213, %s202
        $region40: #{tpu_custom_call.1} parent=27 // pred_fallthru
          _
      $region28: #{tpu_custom_call.1} parent=5 // pred_fallthru
        _
      %p219 = scmp.le.s32.totalorder 2, %s17
      // Predicated region
      $region41: #{tpu_custom_call.1} parent=5 // pred_check
        %p220 = pneg %p219
      $region42: #{tpu_custom_call.1} parent=5 // pred_check_branch
        %222 = sbr.rel (%p220) target = $region44
      $region43: #{tpu_custom_call.1} parent=5 // pred_region
        %s223 = ssub.s32 %s17, 2
        // Predicated region
        $region45: #{tpu_custom_call.1} parent=43 // pred_check
          %p224 = pneg %p98
        $region46: #{tpu_custom_call.1} parent=43 // pred_check_branch
          %226 = sbr.rel (%p224) target = $region48
        $region47: #{tpu_custom_call.1} parent=43 // pred_region
          %s227 = sand.u32 %s83, 1
          %s228 = scalar_lea.sflag [#allocation4], %s227
          %s229 = sand.u32 %s83, 1
          %s230 = smul.addr %s229, 8
          %s231 = scalar_lea.vmem [#allocation7], %s230
          %232 = dma.done %s228, 128
        $region48: #{tpu_custom_call.1} parent=43 // pred_fallthru
          _
      $region44: #{tpu_custom_call.1} parent=5 // pred_fallthru
        _
    $region6: #{tpu_custom_call.1} parent=1 // loop_footer
      %s21 = sadd.s32 1, %s17
    $region7: #{tpu_custom_call.1} parent=1 // loop_footer_branch
      %16 = sbr.rel target = $region3
    $region8: #{tpu_custom_call.1} parent=1 // loop_exit
      _
    %233 = vsyncpa [#allocation3], 1
    %s234 = scalar_lea.sflag [#allocation3], 1
    %235 = vsyncpa %s234, 1
    %236 = vsyncpa [#allocation6], 1
    %s237 = scalar_lea.sflag [#allocation6], 1
    %238 = vsyncpa %s237, 1
    %239 = vsyncpa [#allocation4], 1
    %s240 = scalar_lea.sflag [#allocation4], 1
    %241 = vsyncpa %s240, 1

</llo_original>
